<compile_context>
chip_gen: v5e
topology: v5e:2x2
jax: 0.10.0
libtpu: 0.0.40
codegen_flags: <defaults>
</compile_context>

<pallas_src>
import jax
import jax.numpy as jnp
import numpy as np
from jax.experimental import pallas as pl
from jax.experimental.pallas import tpu as pltpu

DIM = 3          # self.dimension in the PyTorch module
K_AUG = 8        # augmented contraction dim: 3 coords + ||.||^2 + 1, padded to 8
SENTINEL = 1e38  # finite "never wins the min" value for padded dst columns


def _round_up(x, m):
    return ((x + m - 1) // m) * m


def _make_kernel(tm, tn):
    num_chunks = tn // 128

    def kernel(src_ref, dst_ref, out_ref, min_ref):
        # src_ref: (1, TM, 8)   resident across the n axis
        # dst_ref: (1, 8, TN)   streamed along n (double-buffered by Pallas)
        # out_ref: (1, 1, TM)   written on the last n step only (lane-dense)
        # min_ref: (TM, 128)    lane-wide running min of squared distances
        n = pl.program_id(2)

        @pl.when(n == 0)
        def _init():
            min_ref[...] = jnp.full((tm, 128), jnp.inf, dtype=jnp.float32)

        # d2[m, n] = ||s_m||^2 + ||t_n||^2 - 2 s_m.t_n, entirely on the MXU.
        d2 = jnp.dot(src_ref[0], dst_ref[0],
                     preferred_element_type=jnp.float32)           # (TM, TN)

        # Lane-wide running min: pure VALU, no per-step cross-lane reduce.
        acc = min_ref[...]
        for j in range(num_chunks):
            acc = jnp.minimum(acc, d2[:, j * 128:(j + 1) * 128])
        min_ref[...] = acc

        @pl.when(n == pl.num_programs(2) - 1)
        def _finalize():
            # One cross-lane reduce + relayout per m-tile; clamp then sqrt
            # (both monotone, so they commute with the min).
            m = jnp.min(min_ref[...], axis=1)                       # (TM,)
            out_ref[0, 0, :] = jnp.sqrt(jnp.maximum(m, 0.0))

    return kernel


def single_side_chamfer(pc_src, pc_dst, *, tm=512, tn=2048):
    """pc_src: (B, 3, M), pc_dst: (B, 3, N) -> (B, M) float32."""
    B, C, M = pc_src.shape
    Bd, Cd, N = pc_dst.shape
    assert B == Bd and C == DIM and Cd == DIM

    # ---- tile selection --------------------------------------------------
    m8 = _round_up(M, 8)
    TM = min(_round_up(tm, 8), m8)
    if TM < m8:
        # More than one m-tile: output block's last dim must be a lane multiple.
        TM = _round_up(TM, 128)
    # Megacore (v7x: 2 TensorCores). With B == 1 and a single m-tile the second
    # core idles; split M into >= 2 lane-aligned tiles when it is big enough.
    if B == 1 and TM >= m8 and M > 256:
        TM = _round_up((M + 1) // 2, 128)
    TN = min(_round_up(tn, 128), _round_up(N, 128))
    M_pad = _round_up(M, TM)
    N_pad = _round_up(N, TN)

    # ---- augmented operands (O(B*(M+N)) wrapper work, O(B*M*N) in-kernel) --
    src = pc_src.astype(jnp.float32)
    dst = pc_dst.astype(jnp.float32)
    # Distance-invariant recentering limits f32 cancellation in
    # ||s||^2 + ||t||^2 - 2 s.t  vs the direct (s - t)^2 form.
    centroid = jnp.mean(dst, axis=2, keepdims=True)                 # (B, 3, 1)
    src = src - centroid
    dst = dst - centroid

    src_t = jnp.swapaxes(src, 1, 2)                                 # (B, M, 3)
    s2 = jnp.sum(src_t * src_t, axis=2, keepdims=True)              # (B, M, 1)
    src_aug = jnp.concatenate(
        [src_t, s2, jnp.ones((B, M, 1), jnp.float32),
         jnp.zeros((B, M, K_AUG - DIM - 2), jnp.float32)], axis=2)  # (B, M, 8)
    if M_pad != M:
        src_aug = jnp.pad(src_aug, ((0, 0), (0, M_pad - M), (0, 0)))

    t2 = jnp.sum(dst * dst, axis=1, keepdims=True)                  # (B, 1, N)
    dst_aug = jnp.concatenate(
        [-2.0 * dst, jnp.ones((B, 1, N), jnp.float32), t2,
         jnp.zeros((B, K_AUG - DIM - 2, N), jnp.float32)], axis=1)  # (B, 8, N)
    if N_pad != N:
        # Padded columns: zero coords, zero '1' row, huge finite ||t||^2 so
        # they can never win the min and never create inf/NaN in the dot.
        pad_cols = jnp.zeros((B, K_AUG, N_pad - N), jnp.float32)
        pad_cols = pad_cols.at[:, DIM + 1, :].set(SENTINEL)
        dst_aug = jnp.concatenate([dst_aug, pad_cols], axis=2)

    grid = (B, M_pad // TM, N_pad // TN)
    kernel = _make_kernel(TM, TN)

    out = pl.pallas_call(
        kernel,
        out_shape=jax.ShapeDtypeStruct((B, 1, M_pad), jnp.float32),
        grid_spec=pltpu.PrefetchScalarGridSpec(
            num_scalar_prefetch=0,
            grid=grid,
            in_specs=[
                # src tile ignores n -> DMA'd once per (b, m-tile), resident.
                pl.BlockSpec((1, TM, K_AUG), lambda b, m, n: (b, m, 0)),
                # dst tiles streamed along n.
                pl.BlockSpec((1, K_AUG, TN), lambda b, m, n: (b, 0, n)),
            ],
            out_specs=pl.BlockSpec((1, 1, TM), lambda b, m, n: (b, 0, m)),
            scratch_shapes=[pltpu.VMEM((TM, 128), jnp.float32)],
        ),
        compiler_params=pltpu.CompilerParams(
            dimension_semantics=("parallel", "parallel", "arbitrary"),
            # 32 MB fits every generation (v7x physical VMEM is 64 MiB) and
            # lifts v5e's 16 MiB scoped default.
            vmem_limit_bytes=32 * 1024 * 1024,
        ),
    )(src_aug, dst_aug)
    return out[:, 0, :M]


def _reference(pc_src, pc_dst):
    # Pure-JAX reference mirroring the PyTorch code exactly.
    src_e = pc_src[:, :, :, None]   # (B, 3, M, 1)
    dst_e = pc_dst[:, :, None, :]   # (B, 3, 1, N)
    diff = jnp.sqrt(jnp.sum((src_e - dst_e) ** 2, axis=1))  # (B, M, N)
    return jnp.min(diff, axis=2)    # (B, M)


def _check(B, M, N, key, **tile_kwargs):
    k1, k2 = jax.random.split(key)
    pc_src = jax.random.normal(k1, (B, DIM, M), dtype=jnp.float32)
    pc_dst = jax.random.normal(k2, (B, DIM, N), dtype=jnp.float32)

    out = jax.block_until_ready(single_side_chamfer(pc_src, pc_dst, **tile_kwargs))
    ref = jax.block_until_ready(_reference(pc_src, pc_dst))

    assert out.shape == (B, M)
    np.testing.assert_allclose(np.asarray(out), np.asarray(ref),
                               rtol=1e-3, atol=1e-3)


if __name__ == "__main__":
    key = jax.random.PRNGKey(0)
    k1, k2, k3 = jax.random.split(key, 3)

    # Tiny case (block == full array dims path), same shapes as the module doc.
    _check(B=2, M=8, N=16, key=k1)
    # Ragged M/N with sentinel-padded dst columns, single m/n tile per batch.
    _check(B=2, M=200, N=640, key=k2)
    # B=1 megacore split + multi n-tile accumulation + padded src rows.
    _check(B=1, M=384, N=640, key=k3, tn=256)

    print("KERNEL_OK")
</pallas_src>

<mosaic_0001>
module attributes {stable_mosaic.version = 11 : i64} {
  func.func @kernel(%arg0: i32, %arg1: i32, %arg2: i32, %arg3: memref<1x8x8xf32, #tpu.memory_space<vmem>>, %arg4: memref<1x8x128xf32, #tpu.memory_space<vmem>>, %arg5: memref<1x1x8xf32, #tpu.memory_space<vmem>>, %arg6: memref<8x128xf32, #tpu.memory_space<vmem>>) attributes {dimension_semantics = [#tpu.dimension_semantics<parallel>, #tpu.dimension_semantics<parallel>, #tpu.dimension_semantics<arbitrary>], iteration_bounds = array<i64: 2, 1, 1>, scalar_prefetch = 0 : i64, scratch_operands = 1 : i64, tpu.core_type = #tpu.core_type<tc>, window_params = [{transform_indices = @transform_0, window_bounds = array<i64: 1, 8, 8>}, {transform_indices = @transform_1, window_bounds = array<i64: 1, 8, 128>}, {transform_indices = @transform_2, window_bounds = array<i64: 1, 1, 8>}]} {
    %c0_i32 = arith.constant 0 : i32
    %0 = arith.cmpi eq, %arg2, %c0_i32 : i32
    %1 = arith.extui %0 : i1 to i32
    %c0_i32_0 = arith.constant 0 : i32
    %2 = arith.cmpi ne, %1, %c0_i32_0 : i32
    scf.if %2 {
      %cst_12 = arith.constant 0x7F800000 : f32
      %14 = vector.broadcast %cst_12 : f32 to vector<8x128xf32>
      %c0_13 = arith.constant 0 : index
      %c0_14 = arith.constant 0 : index
      %15 = vector.load %arg6[%c0_13, %c0_14] : memref<8x128xf32, #tpu.memory_space<vmem>>, vector<8x128xf32>
      tpu.vector_store %arg6[%c0_13, %c0_14], %14 {strides = array<i32>} : memref<8x128xf32, #tpu.memory_space<vmem>>, vector<8x128xf32>,
    } else {
    }
    %c0 = arith.constant 0 : index
    %c0_1 = arith.constant 0 : index
    %c0_2 = arith.constant 0 : index
    %3 = vector.load %arg3[%c0, %c0_1, %c0_2] : memref<1x8x8xf32, #tpu.memory_space<vmem>>, vector<1x8x8xf32>
    %4 = vector.shape_cast %3 : vector<1x8x8xf32> to vector<8x8xf32>
    %c0_3 = arith.constant 0 : index
    %c0_4 = arith.constant 0 : index
    %c0_5 = arith.constant 0 : index
    %5 = vector.load %arg4[%c0_3, %c0_4, %c0_5] : memref<1x8x128xf32, #tpu.memory_space<vmem>>, vector<1x8x128xf32>
    %6 = vector.shape_cast %5 : vector<1x8x128xf32> to vector<8x128xf32>
    %cst = arith.constant dense<0.000000e+00> : vector<8x128xf32>
    %7 = tpu.matmul %4, %6, %cst {dimension_numbers = #tpu.dot_dimension_numbers<[1], [0], [0], [1], [0, 0, 1, 1], [], []>} : vector<8x8xf32>, vector<8x128xf32>, vector<8x128xf32> -> vector<8x128xf32>
    %c0_6 = arith.constant 0 : index
    %c0_7 = arith.constant 0 : index
    %8 = vector.load %arg6[%c0_6, %c0_7] : memref<8x128xf32, #tpu.memory_space<vmem>>, vector<8x128xf32>
    %9 = arith.minimumf %8, %7 : vector<8x128xf32>
    %c0_8 = arith.constant 0 : index
    %c0_9 = arith.constant 0 : index
    %10 = vector.load %arg6[%c0_8, %c0_9] : memref<8x128xf32, #tpu.memory_space<vmem>>, vector<8x128xf32>
    tpu.vector_store %arg6[%c0_8, %c0_9], %9 {strides = array<i32>} : memref<8x128xf32, #tpu.memory_space<vmem>>, vector<8x128xf32>,
    %c0_i32_10 = arith.constant 0 : i32
    %11 = arith.cmpi eq, %arg2, %c0_i32_10 : i32
    %12 = arith.extui %11 : i1 to i32
    %c0_i32_11 = arith.constant 0 : i32
    %13 = arith.cmpi ne, %12, %c0_i32_11 : i32
    scf.if %13 {
      %c0_12 = arith.constant 0 : index
      %c0_13 = arith.constant 0 : index
      %14 = vector.load %arg6[%c0_12, %c0_13] : memref<8x128xf32, #tpu.memory_space<vmem>>, vector<8x128xf32>
      %cst_14 = arith.constant dense<0x7F800000> : vector<8xf32>
      %15 = vector.multi_reduction <minimumf>, %14, %cst_14 [1] : vector<8x128xf32> to vector<8xf32>
      %cst_15 = arith.constant 0.000000e+00 : f32
      %16 = vector.broadcast %cst_15 : f32 to vector<8xf32>
      %17 = arith.maximumf %15, %16 : vector<8xf32>
      %18 = math.sqrt %17 : vector<8xf32>
      %c0_16 = arith.constant 0 : index
      %c0_17 = arith.constant 0 : index
      %c0_18 = arith.constant 0 : index
      %19 = vector.load %arg5[%c0_16, %c0_17, %c0_18] : memref<1x1x8xf32, #tpu.memory_space<vmem>>, vector<1x1x8xf32>
      %20 = vector.shape_cast %19 : vector<1x1x8xf32> to vector<8xf32>
      %21 = vector.shape_cast %18 : vector<8xf32> to vector<1x1x8xf32>
      tpu.vector_store %arg5[%c0_16, %c0_17, %c0_18], %21 {strides = array<i32>} : memref<1x1x8xf32, #tpu.memory_space<vmem>>, vector<1x1x8xf32>,
    } else {
    }
    return
  }
  func.func @transform_0(%arg0: i32, %arg1: i32, %arg2: i32) -> (i32, i32, i32) {
    %c0_i32 = arith.constant 0 : i32
    %c0_i32_0 = arith.constant 0 : i32
    return %arg0, %arg1, %c0_i32 : i32, i32, i32
  }
  func.func @transform_1(%arg0: i32, %arg1: i32, %arg2: i32) -> (i32, i32, i32) {
    %c0_i32 = arith.constant 0 : i32
    %c0_i32_0 = arith.constant 0 : i32
    return %arg0, %c0_i32, %arg2 : i32, i32, i32
  }
  func.func @transform_2(%arg0: i32, %arg1: i32, %arg2: i32) -> (i32, i32, i32) {
    %c0_i32 = arith.constant 0 : i32
    %c0_i32_0 = arith.constant 0 : i32
    return %arg0, %c0_i32, %arg1 : i32, i32, i32
  }
}

</mosaic_0001>

<llo_original>
// kernel: tpu_custom_call.1
$region0: #{tpu_custom_call.1}
  #allocation0 [shape = 'u32[]', space=smem, size = 0x4, offset = 0x4, fixed_abs, tag = 'smem constant byte address 0x4 - core index']
  #allocation1 [shape = 'u32[72,128]{1,0:T(1,128)}', space=vmem, size = 0x9000, scoped, tag = 'internal scratch']
  #allocation2 [shape = 'f32[8,128]{1,0:T(8,128)}', space=vmem, size = 0x1000, scoped, tag = 'scratch operand']
  %s0 = inlined_call_operand.hbm [shape: f32[2,8,8], index: 0, kind: input, shape index: {}]
  %s1 = inlined_call_operand.hbm [shape: f32[2,8,128], index: 1, kind: input, shape index: {}]
  %s2 = inlined_call_operand.hbm [shape: f32[2,1,8], index: 2, kind: output, shape index: {}]
  %s3 = sld [smem:[#allocation0]]
  $region57: #{tpu_custom_call.1} parent=0
    _
  %s5 = ssub.s32 1, %s3
  %s6 = scalar_select 0, %s5, %s3
  $region1: #{tpu_custom_call.1} parent=0
    #allocation3 [shape = 'u8[8192]{0}', space=vmem, size = 0x2000, scoped, tag = 'input window, operand 0']
    #allocation4 [shape = 's32[2]{0}', space=sflag, size = 0x8, scoped, tag = 'scoped memory for tpu_custom_call.1']
    #allocation5 [shape = 's32[2]{0}', space=sflag, size = 0x8, scoped, tag = 'scoped memory for tpu_custom_call.1']
    #allocation6 [shape = 'u8[8192]{0}', space=vmem, size = 0x2000, scoped, tag = 'input window, operand 1']
    #allocation7 [shape = 's32[2]{0}', space=sflag, size = 0x8, scoped, tag = 'scoped memory for tpu_custom_call.1']
    #allocation8 [shape = 'u8[1024]{0}', space=vmem, size = 0x400, scoped, tag = 'output window, operand 0']
    %7 = vsyncpa [#allocation4], 0
    %s8 = scalar_lea.sflag [#allocation4], 1
    %9 = vsyncpa %s8, 0
    %10 = vsyncpa [#allocation7], 0
    %s11 = scalar_lea.sflag [#allocation7], 1
    %12 = vsyncpa %s11, 0
    %13 = vsyncpa [#allocation5], 0
    %s14 = scalar_lea.sflag [#allocation5], 1
    %15 = vsyncpa %s14, 0
    loop: start=0, step=1, limit=4
    $region2: #{tpu_custom_call.1} parent=1 // loop_pre_header
      _
    $region3: #{tpu_custom_call.1} parent=1 // loop_header
      %s17 = sphi 0, %s21
      %p18 = scmp.ge.s32.totalorder %s17, 4
      %s24 = sphi 0, %s43
      %s25 = sphi 0, %s39
      %s26 = sphi 0, %s35
      %s27 = sphi 0, %s24
      %s28 = sphi 0, %s25
      %s29 = sphi 0, %s26
      %s30 = sphi 0, %s27
      %s31 = sphi 0, %s28
      %s32 = sphi 0, %s29
      %s48 = sphi 0, %s50
      %s51 = sphi 0, %s48
      %s52 = sphi 0, %s51
      %s68 = sphi 0, %s52
      %s76 = sphi 0, %s78
      %s79 = sphi 0, %s76
      %s80 = sphi 0, %s79
      %s96 = sphi 0, %s80
      %s104 = sphi 0, %s106
      %s107 = sphi 0, %s104
      %s108 = sphi 0, %s107
      %s124 = sphi 0, %s108
    $region4: #{tpu_custom_call.1} parent=1 // loop_header_branch
      %20 = sbr.rel (%p18) target = $region8
    $region5: #{tpu_custom_call.1} parent=1 // loop_body
      %s22 = ssub.s32 %s17, 1
      %s23 = ssub.s32 %s17, 2
      %s33 = sadd.s32 1, %s26
      %p34 = scmp.ge.s32.totalorder %s33, 1
      %s35 = scalar_select %p34, 0, %s33
      %s36 = sadd.s32 1, %s25
      %s37 = scalar_select %p34, %s36, %s25
      %p38 = scmp.ge.s32.totalorder %s37, 1
      %s39 = scalar_select %p38, 0, %s37
      %s40 = sadd.s32 1, %s24
      %s41 = scalar_select %p38, %s40, %s24
      %p42 = scmp.ge.s32.totalorder %s41, 2
      %s43 = scalar_select %p42, 0, %s41
      %s44 = ssub.s32 %s24, %s43
      %s45 = ssub.s32 %s25, %s39
      %s46 = sor.u32 %s44, %s45
      %p47 = scmp.eq.s32.totalorder %s46, 0
      %s49 = sadd.s32 %s48, 1
      %s50 = scalar_select %p47, %s48, %s49
      %p53 = pneg %p47
      %p54 = scmp.eq.s32.totalorder %s17, 1
      %p55 = por %p53, %p54
      %p56 = scmp.ne.s32.totalorder %s48, %s51
      %p57 = scmp.eq.s32.totalorder %s17, 0
      %p58 = por %p56, %p57
      %p59 = scmp.ne.s32.totalorder %s48, %s51
      %p60 = scmp.eq.s32.totalorder %s22, 1
      %p61 = por %p59, %p60
      %p62 = scmp.ne.s32.totalorder %s51, %s52
      %p63 = scmp.eq.s32.totalorder %s22, 0
      %p64 = por %p62, %p63
      %p65 = scmp.ne.s32.totalorder %s51, %s52
      %p66 = scmp.eq.s32.totalorder %s23, 1
      %p67 = por %p65, %p66
      %p69 = scmp.ne.s32.totalorder %s52, %s68
      %p70 = scmp.eq.s32.totalorder %s23, 0
      %p71 = por %p69, %p70
      %s72 = ssub.s32 %s24, %s43
      %s73 = ssub.s32 %s26, %s35
      %s74 = sor.u32 %s72, %s73
      %p75 = scmp.eq.s32.totalorder %s74, 0
      %s77 = sadd.s32 %s76, 1
      %s78 = scalar_select %p75, %s76, %s77
      %p81 = pneg %p75
      %p82 = scmp.eq.s32.totalorder %s17, 1
      %p83 = por %p81, %p82
      %p84 = scmp.ne.s32.totalorder %s76, %s79
      %p85 = scmp.eq.s32.totalorder %s17, 0
      %p86 = por %p84, %p85
      %p87 = scmp.ne.s32.totalorder %s76, %s79
      %p88 = scmp.eq.s32.totalorder %s22, 1
      %p89 = por %p87, %p88
      %p90 = scmp.ne.s32.totalorder %s79, %s80
      %p91 = scmp.eq.s32.totalorder %s22, 0
      %p92 = por %p90, %p91
      %p93 = scmp.ne.s32.totalorder %s79, %s80
      %p94 = scmp.eq.s32.totalorder %s23, 1
      %p95 = por %p93, %p94
      %p97 = scmp.ne.s32.totalorder %s80, %s96
      %p98 = scmp.eq.s32.totalorder %s23, 0
      %p99 = por %p97, %p98
      %s100 = ssub.s32 %s24, %s43
      %s101 = ssub.s32 %s25, %s39
      %s102 = sor.u32 %s100, %s101
      %p103 = scmp.eq.s32.totalorder %s102, 0
      %s105 = sadd.s32 %s104, 1
      %s106 = scalar_select %p103, %s104, %s105
      %p109 = pneg %p103
      %p110 = scmp.eq.s32.totalorder %s17, 1
      %p111 = por %p109, %p110
      %p112 = scmp.ne.s32.totalorder %s104, %s107
      %p113 = scmp.eq.s32.totalorder %s17, 0
      %p114 = por %p112, %p113
      %p115 = scmp.ne.s32.totalorder %s104, %s107
      %p116 = scmp.eq.s32.totalorder %s22, 1
      %p117 = por %p115, %p116
      %p118 = scmp.ne.s32.totalorder %s107, %s108
      %p119 = scmp.eq.s32.totalorder %s22, 0
      %p120 = por %p118, %p119
      %p121 = scmp.ne.s32.totalorder %s107, %s108
      %p122 = scmp.eq.s32.totalorder %s23, 1
      %p123 = por %p121, %p122
      %p125 = scmp.ne.s32.totalorder %s108, %s124
      %p126 = scmp.eq.s32.totalorder %s23, 0
      %p127 = por %p125, %p126
      %p128 = scmp.le.s32.totalorder 1, %s17
      %p129 = scmp.lt.s32.totalorder %s17, 3
      %p130 = pnand %p128, %p129
      %p131 = pneg %p130
      // Predicated region
      $region9: #{tpu_custom_call.1} parent=5 // pred_check
        _
      $region10: #{tpu_custom_call.1} parent=5 // pred_check_branch
        %133 = sbr.rel (%p130) target = $region12
      $region11: #{tpu_custom_call.1} parent=5 // pred_region
        %s134 = ssub.s32 %s17, 1
      $region12: #{tpu_custom_call.1} parent=5 // pred_fallthru
        _
      %p135 = scmp.lt.s32.totalorder %s17, 2
      // Predicated region
      $region13: #{tpu_custom_call.1} parent=5 // pred_check
        %p136 = pneg %p135
      $region14: #{tpu_custom_call.1} parent=5 // pred_check_branch
        %138 = sbr.rel (%p136) target = $region16
      $region15: #{tpu_custom_call.1} parent=5 // pred_region
        // Predicated region
        $region17: #{tpu_custom_call.1} parent=15 // pred_check
          %p139 = pneg %p58
        $region18: #{tpu_custom_call.1} parent=15 // pred_check_branch
          %141 = sbr.rel (%p139) target = $region20
        $region19: #{tpu_custom_call.1} parent=15 // pred_region
          %s142 = sand.u32 %s48, 1
          %s143 = scalar_lea.sflag [#allocation4], %s142
          %s144 = sand.u32 %s48, 1
          %s145 = smul.addr %s144, 8
          %s146 = scalar_lea.vmem [#allocation3], %s145
          %148 = vsyncadd %s143, 0
          %s149 = sadd.s32 %s25, %s24
          %s150 = smul.addr %s149, 8
          %s151 = scalar_lea.hbm %s0, %s150
          %s153 = sshll.u32 %s151, 4
          %s154 = int_to_ptr.hbm [resolvable:$true] %s153
          %s155 = sshll.u32 %s146, 4
          %s156 = int_to_ptr.vmem [resolvable:$true] %s155
          %158 = dma.hbm_to_vmem [thread:$0]  %s154, 128, %s156, %s143
        $region20: #{tpu_custom_call.1} parent=15 // pred_fallthru
          _
        // Predicated region
        $region21: #{tpu_custom_call.1} parent=15 // pred_check
          %p159 = pneg %p86
        $region22: #{tpu_custom_call.1} parent=15 // pred_check_branch
          %161 = sbr.rel (%p159) target = $region24
        $region23: #{tpu_custom_call.1} parent=15 // pred_region
          %s162 = sand.u32 %s76, 1
          %s163 = scalar_lea.sflag [#allocation7], %s162
          %s164 = sand.u32 %s76, 1
          %s165 = smul.addr %s164, 8
          %s166 = scalar_lea.vmem [#allocation6], %s165
          %168 = vsyncadd %s163, 0
          %s169 = sadd.s32 %s26, %s24
          %s170 = smul.addr %s169, 8
          %s171 = scalar_lea.hbm %s1, %s170
          %s173 = sshll.u32 %s171, 4
          %s174 = int_to_ptr.hbm [resolvable:$true] %s173
          %s175 = sshll.u32 %s166, 4
          %s176 = int_to_ptr.vmem [resolvable:$true] %s175
          %178 = dma.hbm_to_vmem [thread:$0]  %s174, 128, %s176, %s163
        $region24: #{tpu_custom_call.1} parent=15 // pred_fallthru
          _
      $region16: #{tpu_custom_call.1} parent=5 // pred_fallthru
        _
      %p179 = scmp.le.s32.totalorder 1, %s17
      %p180 = scmp.lt.s32.totalorder %s17, 3
      %p181 = pnand %p179, %p180
      %p182 = pneg %p181
      // Predicated region
      $region25: #{tpu_custom_call.1} parent=5 // pred_check
        _
      $region26: #{tpu_custom_call.1} parent=5 // pred_check_branch
        %184 = sbr.rel (%p181) target = $region28
      $region27: #{tpu_custom_call.1} parent=5 // pred_region
        %s185 = ssub.s32 %s17, 1
        %s186 = sand.u32 %s51, 1
        %s187 = scalar_lea.sflag [#allocation4], %s186
        %s188 = sand.u32 %s51, 1
        %s189 = smul.addr %s188, 8
        %s190 = scalar_lea.vmem [#allocation3], %s189
        // Predicated region
        $region29: #{tpu_custom_call.1} parent=27 // pred_check
          %p191 = pneg %p64
        $region30: #{tpu_custom_call.1} parent=27 // pred_check_branch
          %193 = sbr.rel (%p191) target = $region32
        $region31: #{tpu_custom_call.1} parent=27 // pred_region
          %195 = dma.done %s187, 128
        $region32: #{tpu_custom_call.1} parent=27 // pred_fallthru
          _
        %s196 = sand.u32 %s79, 1
        %s197 = scalar_lea.sflag [#allocation7], %s196
        %s198 = sand.u32 %s79, 1
        %s199 = smul.addr %s198, 8
        %s200 = scalar_lea.vmem [#allocation6], %s199
        // Predicated region
        $region33: #{tpu_custom_call.1} parent=27 // pred_check
          %p201 = pneg %p92
        $region34: #{tpu_custom_call.1} parent=27 // pred_check_branch
          %203 = sbr.rel (%p201) target = $region36
        $region35: #{tpu_custom_call.1} parent=27 // pred_region
          %205 = dma.done %s197, 128
        $region36: #{tpu_custom_call.1} parent=27 // pred_fallthru
          _
        %s206 = sand.u32 %s51, 1
        %s207 = scalar_lea.sflag [#allocation4], %s206
        %s208 = sand.u32 %s51, 1
        %s209 = smul.addr %s208, 8
        %s210 = scalar_lea.vmem [#allocation3], %s209
        %p211 = pneg %p64
        %p212 = pneg %p61
        %s213 = sand.u32 %s79, 1
        %s214 = scalar_lea.sflag [#allocation7], %s213
        %s215 = sand.u32 %s79, 1
        %s216 = smul.addr %s215, 8
        %s217 = scalar_lea.vmem [#allocation6], %s216
        %p218 = pneg %p92
        %p219 = pneg %p89
        %p220 = pneg %p120
        %p221 = pneg %p117
        %s222 = sand.u32 %s107, 1
        %s223 = scalar_lea.sflag [#allocation5], %s222
        %s224 = sand.u32 %s107, 1
        %s225 = scalar_lea.vmem [#allocation8], %s224
        %p226 = scmp.eq.s32.totalorder %s29, 0
        // Predicated region
        $region37: #{tpu_custom_call.1} parent=27 // pred_check
          %p227 = pneg %p226
        $region38: #{tpu_custom_call.1} parent=27 // pred_check_branch
          %229 = sbr.rel (%p227) target = $region40
        $region39: #{tpu_custom_call.1} parent=27 // pred_region
          %230 = vst [vmem:[#allocation2] sm:$0xff] inf
        $region40: #{tpu_custom_call.1} parent=27 // pred_fallthru
          _
        %v231 = vld [vmem:[%s190] sm:$0xff]
        %v232 = vld [vmem:[%s200] sm:$0xff]
        %vm233 = vcmask 64512
        %v235 = vsel %vm233, %v231, 0
        %237 = vmatpush.msra.mxu0 0.0
        %238 = vmatpush.msra.mxu0 0.0
        %239 = vmatpush.msra.mxu0 0.0
        %240 = vmatpush.msra.mxu0 0.0
        %241 = vmatpush.msra.mxu0 0.0
        %242 = vmatpush.msra.mxu0 0.0
        %243 = vmatpush.msra.mxu0 0.0
        %244 = vmatpush.msra.mxu0 0.0
        %245 = vmatpush.msra.mxu0 0.0
        %246 = vmatpush.msra.mxu0 0.0
        %247 = vmatpush.msra.mxu0 0.0
        %248 = vmatpush.msra.mxu0 0.0
        %249 = vmatpush.msra.mxu0 0.0
        %250 = vmatpush.msra.mxu0 0.0
        %251 = vmatpush.msra.mxu0 0.0
        %252 = vmatpush.msra.mxu0 %v232
        %253 = vmatmul.f32.gmra.mxu0 %v235
        %v254 = vpop.f32.mrf.mxu0
        %v255 = vadd.f32 0.0, %v254
        %256 = vdwg.mxu0
        %v257 = vld [vmem:[#allocation2] sm:$0xff]
        %v258 = vmin.f32 %v257, %v255
        %259 = vst [vmem:[#allocation2] sm:$0xff] %v258
        // Predicated region
        $region41: #{tpu_custom_call.1} parent=27 // pred_check
          %p260 = pneg %p226
        $region42: #{tpu_custom_call.1} parent=27 // pred_check_branch
          %262 = sbr.rel (%p260) target = $region44
        $region43: #{tpu_custom_call.1} parent=27 // pred_region
          %v263 = vld [vmem:[#allocation2] sm:$0xff]
          %264 = vmin.xlane.f32.xlu0 %v263
          %v265 = vpop.xlane.xlu0 %264
          %v266 = vmax.f32 %v265, 0.0
          %v267 = vrsqrt.pop %v266
          %v268 = vmul.f32 %v267, %v266
          %v269 = vmul.f32 %v268, %v267
          %v270 = vmul.f32 0.5, %v269
          %v271 = vsub.f32 1.5, %v270
          %v272 = vmul.f32 %v267, %v271
          %v273 = vmul.f32 %v266, %v272
          %vm274 = vcmp.eq.f32.partialorder %v266, inf
          %v275 = vsel %vm274, %v266, %v273
          %vm276 = vcmp.eq.f32.partialorder %v266, 0.0
          %v277 = vand.u32 %v266, 2147483648
          %v278 = vsel %vm276, %v277, %v275
          %v280 = vlaneseq
          %v281 = vand.u32 %v280, 127
          %v282 = vperm.slane %v278, %v281
          %vm284 = vcmask 57344
          %285 = vst.msk [vmem:[%s225] sm:$0x1] %vm284, %v282
        $region44: #{tpu_custom_call.1} parent=27 // pred_fallthru
          _
        %s286 = sand.u32 %s107, 1
        %s287 = scalar_lea.sflag [#allocation5], %s286
        %s288 = sand.u32 %s107, 1
        %s289 = scalar_lea.vmem [#allocation8], %s288
        // Predicated region
        $region45: #{tpu_custom_call.1} parent=27 // pred_check
          %p290 = pneg %p117
        $region46: #{tpu_custom_call.1} parent=27 // pred_check_branch
          %292 = sbr.rel (%p290) target = $region48
        $region47: #{tpu_custom_call.1} parent=27 // pred_region
          %294 = vsyncadd %s287, 0
          %s295 = sadd.s32 %s28, %s27
          %s296 = scalar_lea.hbm %s2, %s295
          %s298 = sshll.u32 %s289, 4
          %s299 = int_to_ptr.vmem [resolvable:$true] %s298
          %s300 = sshll.u32 %s296, 4
          %s301 = int_to_ptr.hbm [resolvable:$true] %s300
          %303 = dma.vmem_to_hbm [thread:$0]  %s299, 16, %s301, %s287
        $region48: #{tpu_custom_call.1} parent=27 // pred_fallthru
          _
      $region28: #{tpu_custom_call.1} parent=5 // pred_fallthru
        _
      %p304 = scmp.le.s32.totalorder 2, %s17
      // Predicated region
      $region49: #{tpu_custom_call.1} parent=5 // pred_check
        %p305 = pneg %p304
      $region50: #{tpu_custom_call.1} parent=5 // pred_check_branch
        %307 = sbr.rel (%p305) target = $region52
      $region51: #{tpu_custom_call.1} parent=5 // pred_region
        %s308 = ssub.s32 %s17, 2
        // Predicated region
        $region53: #{tpu_custom_call.1} parent=51 // pred_check
          %p309 = pneg %p123
        $region54: #{tpu_custom_call.1} parent=51 // pred_check_branch
          %311 = sbr.rel (%p309) target = $region56
        $region55: #{tpu_custom_call.1} parent=51 // pred_region
          %s312 = sand.u32 %s108, 1
          %s313 = scalar_lea.sflag [#allocation5], %s312
          %s314 = sand.u32 %s108, 1
          %s315 = scalar_lea.vmem [#allocation8], %s314
          %317 = dma.done %s313, 16
        $region56: #{tpu_custom_call.1} parent=51 // pred_fallthru
          _
      $region52: #{tpu_custom_call.1} parent=5 // pred_fallthru
        _
    $region6: #{tpu_custom_call.1} parent=1 // loop_footer
      %s21 = sadd.s32 1, %s17
    $region7: #{tpu_custom_call.1} parent=1 // loop_footer_branch
      %16 = sbr.rel target = $region3
    $region8: #{tpu_custom_call.1} parent=1 // loop_exit
      _
    %318 = vsyncpa [#allocation4], 1
    %s319 = scalar_lea.sflag [#allocation4], 1
    %320 = vsyncpa %s319, 1
    %321 = vsyncpa [#allocation7], 1
    %s322 = scalar_lea.sflag [#allocation7], 1
    %323 = vsyncpa %s322, 1
    %324 = vsyncpa [#allocation5], 1
    %s325 = scalar_lea.sflag [#allocation5], 1
    %326 = vsyncpa %s325, 1

</llo_original>
